<compile_context>
chip_gen: v6e
topology: v6e:2x2x1
jax: 0.10.0
libtpu: 0.0.40
codegen_flags: <defaults>
</compile_context>

<pallas_src>
import functools

import jax
import jax.numpy as jnp
from jax.experimental import pallas as pl
from jax.experimental.pallas import tpu as pltpu


def _banded_rsolve_kernel(alphas_ref, q_ref, x_ref, loss_ref, *, T0, T1, n_terms):
    """x = q @ (I + a0*E_T0 + a1*E_T1)^{-1} via exact Neumann series + fused loss."""
    a0 = alphas_ref[0]
    a1 = alphas_ref[1]
    q = q_ref[...]
    M, L = q.shape

    # Column-index masks (hoisted out of the loop; JAX does not CSE broadcasts).
    col = jax.lax.broadcasted_iota(jnp.int32, (M, L), 1)
    keep0 = (col >= T0).astype(jnp.float32)
    keep1 = (col >= T1).astype(jnp.float32)

    # t_k = (-1)^k * q @ N^k ;  x = sum_k t_k.
    # q @ N shifts columns right by T0/T1 (zero fill) scaled by alpha0/alpha1,
    # implemented as an XLU lane roll + VPU mask.
    def term(_, carry):
        x, t = carry
        s0 = pltpu.roll(t, shift=T0, axis=1) * keep0
        s1 = pltpu.roll(t, shift=T1, axis=1) * keep1
        t_next = -(a0 * s0 + a1 * s1)
        return x + t_next, t_next

    x, _ = jax.lax.fori_loop(0, n_terms - 1, term, (q, q), unroll=True)

    x_ref[...] = x.astype(x_ref.dtype)

    # loss = sum(x[0, -T1:]**2): row 0 of the (B*C, L) view is x[0, 0, :].
    # Full-row reduce with an iota tail mask (avoids a non-lane-aligned slice).
    row0 = x[0:1, :]
    tail_mask = jax.lax.broadcasted_iota(jnp.int32, (1, L), 1) >= (L - T1)
    tail = jnp.where(tail_mask, row0, 0.0)
    loss_ref[0, 0] = jnp.sum(tail * tail)


def forward(q, alpha0, alpha1, *, T0, T1):
    B, C, L = q.shape
    # Strictly-positive band offsets are required for A to be unit upper
    # triangular (and for the nilpotent-series solve to be exact).
    assert 0 < T0 < L and 0 < T1 < L, "band offsets must satisfy 0 < T < L"

    M = B * C
    M_pad = pl.cdiv(M, 8) * 8            # pad rows to a sublane multiple
    q2d = q.reshape(M, L).astype(jnp.float32)
    if M_pad != M:
        q2d = jnp.pad(q2d, ((0, M_pad - M), (0, 0)))

    # N^k == 0 once k * min(T0, T1) >= L  ->  exact series length.
    n_terms = pl.cdiv(L, min(T0, T1))

    alphas = jnp.stack([jnp.asarray(alpha0, jnp.float32),
                        jnp.asarray(alpha1, jnp.float32)])

    kernel = functools.partial(_banded_rsolve_kernel, T0=T0, T1=T1, n_terms=n_terms)
    x2d, loss = pl.pallas_call(
        kernel,
        out_shape=(jax.ShapeDtypeStruct((M_pad, L), jnp.float32),
                   jax.ShapeDtypeStruct((1, 1), jnp.float32)),
        in_specs=[pl.BlockSpec(memory_space=pltpu.SMEM),    # [alpha0, alpha1]
                  pl.BlockSpec(memory_space=pltpu.VMEM)],   # q2d
        out_specs=(pl.BlockSpec(memory_space=pltpu.VMEM),   # x2d
                   pl.BlockSpec(memory_space=pltpu.SMEM)),  # loss scalar
    )(alphas, q2d)

    return loss[0, 0], x2d[:M].reshape(B, C, L)


if __name__ == "__main__":
    # Small shapes consistent with the module's forward (scaled-down L, T0, T1).
    B, C, L = 2, 4, 256
    T0, T1 = 32, 64

    alpha0 = jnp.float32(0.4886)
    alpha1 = jnp.float32(0.3893)

    key = jax.random.PRNGKey(0)
    q = jax.random.normal(key, (B, C, L), dtype=jnp.float32)

    loss, x = forward(q, alpha0, alpha1, T0=T0, T1=T1)
    loss = jax.block_until_ready(loss)
    x = jax.block_until_ready(x)

    # Correctness check against a plain-JAX reference mirroring the PyTorch
    # module (dense inverse).
    A = (jnp.eye(L, dtype=jnp.float32)
         + alpha0 * jnp.eye(L, k=T0, dtype=jnp.float32)
         + alpha1 * jnp.eye(L, k=T1, dtype=jnp.float32))
    A_inv_ref = jnp.linalg.inv(A)
    x_ref = q.reshape(B * C, L) @ A_inv_ref
    loss_ref = jnp.sum(x_ref[0, -T1:] ** 2)

    assert jnp.allclose(x, x_ref.reshape(B, C, L), rtol=1e-3, atol=1e-3)
    assert jnp.allclose(loss, loss_ref, rtol=1e-3, atol=1e-3)

    print("KERNEL_OK")
</pallas_src>

<mosaic_0001>
module attributes {stable_mosaic.version = 11 : i64} {
  func.func @_banded_rsolve_kernel(%arg0: memref<2xf32, #tpu.memory_space<smem>>, %arg1: memref<8x256xf32, #tpu.memory_space<vmem>>, %arg2: memref<8x256xf32, #tpu.memory_space<vmem>>, %arg3: memref<1x1xf32, #tpu.memory_space<smem>>) attributes {dimension_semantics = [], scalar_prefetch = 0 : i64, scratch_operands = 0 : i64, tpu.core_type = #tpu.core_type<tc>} {
    %c0 = arith.constant 0 : index
    %0 = memref.load %arg0[%c0] : memref<2xf32, #tpu.memory_space<smem>>
    %c1 = arith.constant 1 : index
    %1 = memref.load %arg0[%c1] : memref<2xf32, #tpu.memory_space<smem>>
    %c0_0 = arith.constant 0 : index
    %c0_1 = arith.constant 0 : index
    %2 = vector.load %arg1[%c0_0, %c0_1] : memref<8x256xf32, #tpu.memory_space<vmem>>, vector<8x256xf32>
    %3 = tpu.iota {dimensions = array<i32: 1>} : vector<8x256xi32>
    %c32_i32 = arith.constant 32 : i32
    %4 = vector.broadcast %c32_i32 : i32 to vector<8x256xi32>
    %5 = arith.cmpi sge, %3, %4 : vector<8x256xi32>
    %6 = arith.extui %5 : vector<8x256xi1> to vector<8x256xi32>
    %7 = arith.sitofp %6 : vector<8x256xi32> to vector<8x256xf32>
    %c64_i32 = arith.constant 64 : i32
    %8 = vector.broadcast %c64_i32 : i32 to vector<8x256xi32>
    %9 = arith.cmpi sge, %3, %8 : vector<8x256xi32>
    %10 = arith.extui %9 : vector<8x256xi1> to vector<8x256xi32>
    %11 = arith.sitofp %10 : vector<8x256xi32> to vector<8x256xf32>
    %c0_i32 = arith.constant 0 : i32
    %c32_i32_2 = arith.constant 32 : i32
    %12 = tpu.dynamic_rotate %2 by %c32_i32_2 dim 1 : vector<8x256xf32>, i32 -> vector<8x256xf32>
    %13 = arith.mulf %12, %7 : vector<8x256xf32>
    %c64_i32_3 = arith.constant 64 : i32
    %14 = tpu.dynamic_rotate %2 by %c64_i32_3 dim 1 : vector<8x256xf32>, i32 -> vector<8x256xf32>
    %15 = arith.mulf %14, %11 : vector<8x256xf32>
    %16 = vector.broadcast %0 : f32 to vector<8x256xf32>
    %17 = arith.mulf %16, %13 : vector<8x256xf32>
    %18 = vector.broadcast %1 : f32 to vector<8x256xf32>
    %19 = arith.mulf %18, %15 : vector<8x256xf32>
    %20 = arith.addf %17, %19 : vector<8x256xf32>
    %cst = arith.constant 0.000000e+00 : f32
    %21 = vector.broadcast %cst : f32 to vector<8x256xf32>
    %22 = arith.subf %21, %20 : vector<8x256xf32>
    %23 = arith.addf %2, %22 : vector<8x256xf32>
    %c1_i32 = arith.constant 1 : i32
    %c32_i32_4 = arith.constant 32 : i32
    %24 = tpu.dynamic_rotate %22 by %c32_i32_4 dim 1 : vector<8x256xf32>, i32 -> vector<8x256xf32>
    %25 = arith.mulf %24, %7 : vector<8x256xf32>
    %c64_i32_5 = arith.constant 64 : i32
    %26 = tpu.dynamic_rotate %22 by %c64_i32_5 dim 1 : vector<8x256xf32>, i32 -> vector<8x256xf32>
    %27 = arith.mulf %26, %11 : vector<8x256xf32>
    %28 = vector.broadcast %0 : f32 to vector<8x256xf32>
    %29 = arith.mulf %28, %25 : vector<8x256xf32>
    %30 = vector.broadcast %1 : f32 to vector<8x256xf32>
    %31 = arith.mulf %30, %27 : vector<8x256xf32>
    %32 = arith.addf %29, %31 : vector<8x256xf32>
    %cst_6 = arith.constant 0.000000e+00 : f32
    %33 = vector.broadcast %cst_6 : f32 to vector<8x256xf32>
    %34 = arith.subf %33, %32 : vector<8x256xf32>
    %35 = arith.addf %23, %34 : vector<8x256xf32>
    %c2_i32 = arith.constant 2 : i32
    %c32_i32_7 = arith.constant 32 : i32
    %36 = tpu.dynamic_rotate %34 by %c32_i32_7 dim 1 : vector<8x256xf32>, i32 -> vector<8x256xf32>
    %37 = arith.mulf %36, %7 : vector<8x256xf32>
    %c64_i32_8 = arith.constant 64 : i32
    %38 = tpu.dynamic_rotate %34 by %c64_i32_8 dim 1 : vector<8x256xf32>, i32 -> vector<8x256xf32>
    %39 = arith.mulf %38, %11 : vector<8x256xf32>
    %40 = vector.broadcast %0 : f32 to vector<8x256xf32>
    %41 = arith.mulf %40, %37 : vector<8x256xf32>
    %42 = vector.broadcast %1 : f32 to vector<8x256xf32>
    %43 = arith.mulf %42, %39 : vector<8x256xf32>
    %44 = arith.addf %41, %43 : vector<8x256xf32>
    %cst_9 = arith.constant 0.000000e+00 : f32
    %45 = vector.broadcast %cst_9 : f32 to vector<8x256xf32>
    %46 = arith.subf %45, %44 : vector<8x256xf32>
    %47 = arith.addf %35, %46 : vector<8x256xf32>
    %c3_i32 = arith.constant 3 : i32
    %c32_i32_10 = arith.constant 32 : i32
    %48 = tpu.dynamic_rotate %46 by %c32_i32_10 dim 1 : vector<8x256xf32>, i32 -> vector<8x256xf32>
    %49 = arith.mulf %48, %7 : vector<8x256xf32>
    %c64_i32_11 = arith.constant 64 : i32
    %50 = tpu.dynamic_rotate %46 by %c64_i32_11 dim 1 : vector<8x256xf32>, i32 -> vector<8x256xf32>
    %51 = arith.mulf %50, %11 : vector<8x256xf32>
    %52 = vector.broadcast %0 : f32 to vector<8x256xf32>
    %53 = arith.mulf %52, %49 : vector<8x256xf32>
    %54 = vector.broadcast %1 : f32 to vector<8x256xf32>
    %55 = arith.mulf %54, %51 : vector<8x256xf32>
    %56 = arith.addf %53, %55 : vector<8x256xf32>
    %cst_12 = arith.constant 0.000000e+00 : f32
    %57 = vector.broadcast %cst_12 : f32 to vector<8x256xf32>
    %58 = arith.subf %57, %56 : vector<8x256xf32>
    %59 = arith.addf %47, %58 : vector<8x256xf32>
    %c4_i32 = arith.constant 4 : i32
    %c32_i32_13 = arith.constant 32 : i32
    %60 = tpu.dynamic_rotate %58 by %c32_i32_13 dim 1 : vector<8x256xf32>, i32 -> vector<8x256xf32>
    %61 = arith.mulf %60, %7 : vector<8x256xf32>
    %c64_i32_14 = arith.constant 64 : i32
    %62 = tpu.dynamic_rotate %58 by %c64_i32_14 dim 1 : vector<8x256xf32>, i32 -> vector<8x256xf32>
    %63 = arith.mulf %62, %11 : vector<8x256xf32>
    %64 = vector.broadcast %0 : f32 to vector<8x256xf32>
    %65 = arith.mulf %64, %61 : vector<8x256xf32>
    %66 = vector.broadcast %1 : f32 to vector<8x256xf32>
    %67 = arith.mulf %66, %63 : vector<8x256xf32>
    %68 = arith.addf %65, %67 : vector<8x256xf32>
    %cst_15 = arith.constant 0.000000e+00 : f32
    %69 = vector.broadcast %cst_15 : f32 to vector<8x256xf32>
    %70 = arith.subf %69, %68 : vector<8x256xf32>
    %71 = arith.addf %59, %70 : vector<8x256xf32>
    %c5_i32 = arith.constant 5 : i32
    %c32_i32_16 = arith.constant 32 : i32
    %72 = tpu.dynamic_rotate %70 by %c32_i32_16 dim 1 : vector<8x256xf32>, i32 -> vector<8x256xf32>
    %73 = arith.mulf %72, %7 : vector<8x256xf32>
    %c64_i32_17 = arith.constant 64 : i32
    %74 = tpu.dynamic_rotate %70 by %c64_i32_17 dim 1 : vector<8x256xf32>, i32 -> vector<8x256xf32>
    %75 = arith.mulf %74, %11 : vector<8x256xf32>
    %76 = vector.broadcast %0 : f32 to vector<8x256xf32>
    %77 = arith.mulf %76, %73 : vector<8x256xf32>
    %78 = vector.broadcast %1 : f32 to vector<8x256xf32>
    %79 = arith.mulf %78, %75 : vector<8x256xf32>
    %80 = arith.addf %77, %79 : vector<8x256xf32>
    %cst_18 = arith.constant 0.000000e+00 : f32
    %81 = vector.broadcast %cst_18 : f32 to vector<8x256xf32>
    %82 = arith.subf %81, %80 : vector<8x256xf32>
    %83 = arith.addf %71, %82 : vector<8x256xf32>
    %c6_i32 = arith.constant 6 : i32
    %c32_i32_19 = arith.constant 32 : i32
    %84 = tpu.dynamic_rotate %82 by %c32_i32_19 dim 1 : vector<8x256xf32>, i32 -> vector<8x256xf32>
    %85 = arith.mulf %84, %7 : vector<8x256xf32>
    %c64_i32_20 = arith.constant 64 : i32
    %86 = tpu.dynamic_rotate %82 by %c64_i32_20 dim 1 : vector<8x256xf32>, i32 -> vector<8x256xf32>
    %87 = arith.mulf %86, %11 : vector<8x256xf32>
    %88 = vector.broadcast %0 : f32 to vector<8x256xf32>
    %89 = arith.mulf %88, %85 : vector<8x256xf32>
    %90 = vector.broadcast %1 : f32 to vector<8x256xf32>
    %91 = arith.mulf %90, %87 : vector<8x256xf32>
    %92 = arith.addf %89, %91 : vector<8x256xf32>
    %cst_21 = arith.constant 0.000000e+00 : f32
    %93 = vector.broadcast %cst_21 : f32 to vector<8x256xf32>
    %94 = arith.subf %93, %92 : vector<8x256xf32>
    %95 = arith.addf %83, %94 : vector<8x256xf32>
    %c0_22 = arith.constant 0 : index
    %c0_23 = arith.constant 0 : index
    %96 = vector.load %arg2[%c0_22, %c0_23] : memref<8x256xf32, #tpu.memory_space<vmem>>, vector<8x256xf32>
    tpu.vector_store %arg2[%c0_22, %c0_23], %95 {strides = array<i32>} : memref<8x256xf32, #tpu.memory_space<vmem>>, vector<8x256xf32>,
    %97 = vector.extract_strided_slice %95 {offsets = [0, 0], sizes = [1, 256], strides = [1, 1]} : vector<8x256xf32> to vector<1x256xf32>
    %98 = tpu.iota {dimensions = array<i32: 1>} : vector<1x256xi32>
    %c192_i32 = arith.constant 192 : i32
    %99 = vector.broadcast %c192_i32 : i32 to vector<1x256xi32>
    %100 = arith.cmpi sge, %98, %99 : vector<1x256xi32>
    %cst_24 = arith.constant 0.000000e+00 : f32
    %101 = vector.broadcast %cst_24 : f32 to vector<1x256xf32>
    %102 = arith.select %100, %97, %101 : vector<1x256xi1>, vector<1x256xf32>
    %103 = arith.mulf %102, %102 : vector<1x256xf32>
    %104 = vector.shape_cast %103 : vector<1x256xf32> to vector<1x1x256xf32>
    %cst_25 = arith.constant dense<0.000000e+00> : vector<1xf32>
    %105 = vector.multi_reduction <add>, %104, %cst_25 [1, 2] : vector<1x1x256xf32> to vector<1xf32>
    %106 = vector.shape_cast %105 : vector<1xf32> to vector<1x1x1xf32>
    %107 = vector.extract %106[0, 0, 0] : f32 from vector<1x1x1xf32>
    %c0_26 = arith.constant 0 : index
    %c0_27 = arith.constant 0 : index
    %108 = memref.load %arg3[%c0_26, %c0_27] : memref<1x1xf32, #tpu.memory_space<smem>>
    memref.store %107, %arg3[%c0_26, %c0_27] : memref<1x1xf32, #tpu.memory_space<smem>>
    return
  }
}

</mosaic_0001>

<llo_original>
// kernel: tpu_custom_call.1
$region0: #{tpu_custom_call.1}
  #allocation0 [shape = 'u32[]', space=smem, size = 0x4, offset = 0x4, fixed_abs, tag = 'smem constant byte address 0x4 - core index']
  #allocation1 [shape = 'u32[144,128]{1,0:T(1,128)}', space=vmem, size = 0x12000, scoped, tag = 'internal scratch']
  %s0 = inlined_call_operand.hbm [shape: f32[2], index: 0, kind: input, shape index: {}]
  %s1 = inlined_call_operand.hbm [shape: f32[8,256], index: 1, kind: input, shape index: {}]
  %s2 = inlined_call_operand.hbm [shape: f32[8,256], index: 2, kind: output, shape index: {0}]
  %s3 = inlined_call_operand.hbm [shape: f32[1,1], index: 3, kind: output, shape index: {1}]
  %4 = xla_tuple %s2, %s3
  %s5 = sld [smem:[#allocation0]]
  $region34: #{tpu_custom_call.1} parent=0
    _
  %s7 = ssub.s32 1, %s5
  %s8 = scalar_select 0, %s7, %s5
  $region1: #{tpu_custom_call.1} parent=0
    #allocation2 [shape = 'u8[512]{0}', space=smem, size = 0x200, scoped, tag = 'input window, operand 0, single buffered']
    #allocation3 [shape = 's32[1]{0}', space=sflag, size = 0x4, scoped, tag = 'scoped memory for tpu_custom_call.1']
    #allocation4 [shape = 's32[1]{0}', space=sflag, size = 0x4, scoped, tag = 'scoped memory for tpu_custom_call.1']
    #allocation5 [shape = 's32[1]{0}', space=sflag, size = 0x4, scoped, tag = 'scoped memory for tpu_custom_call.1']
    #allocation6 [shape = 's32[1]{0}', space=sflag, size = 0x4, scoped, tag = 'scoped memory for tpu_custom_call.1']
    #allocation7 [shape = 'u8[8192]{0}', space=vmem, size = 0x2000, scoped, tag = 'input window, operand 1, single buffered']
    #allocation8 [shape = 'u8[8192]{0}', space=vmem, size = 0x2000, scoped, tag = 'output window, operand 0, single buffered']
    #allocation9 [shape = 'u8[512]{0}', space=smem, size = 0x200, scoped, tag = 'output window, operand 1, single buffered']
    %9 = vsyncpa [#allocation5], 0
    %10 = vsyncpa [#allocation3], 0
    %11 = vsyncpa [#allocation4], 0
    %12 = vsyncpa [#allocation6], 0
    // Predicated region
    $region2: #{tpu_custom_call.1} parent=1 // pred_check
      _
    $region3: #{tpu_custom_call.1} parent=1 // pred_check_branch
      %14 = sbr.rel (0) target = $region5
    $region4: #{tpu_custom_call.1} parent=1 // pred_region
      %s16 = ssub.s32 16, 16
      %17 = vsyncadd [#allocation5], %s16
      %20 = dma.hbm_to_smem %s0, 16, [#allocation2], [#allocation5]
    $region5: #{tpu_custom_call.1} parent=1 // pred_fallthru
      _
    // Predicated region
    $region6: #{tpu_custom_call.1} parent=1 // pred_check
      _
    $region7: #{tpu_custom_call.1} parent=1 // pred_check_branch
      %22 = sbr.rel (0) target = $region9
    $region8: #{tpu_custom_call.1} parent=1 // pred_region
      %s24 = ssub.s32 256, 256
      %25 = vsyncadd [#allocation3], %s24
      %s27 = sshll.u32 [#allocation7], 4
      %s28 = int_to_ptr.vmem [resolvable:$true] %s27
      %30 = dma.hbm_to_vmem [thread:$0]  %s1, 256, %s28, [#allocation3]
    $region9: #{tpu_custom_call.1} parent=1 // pred_fallthru
      _
    // Predicated region
    $region10: #{tpu_custom_call.1} parent=1 // pred_check
      _
    $region11: #{tpu_custom_call.1} parent=1 // pred_check_branch
      %32 = sbr.rel (0) target = $region13
    $region12: #{tpu_custom_call.1} parent=1 // pred_region
      %33 = dma.done [#allocation5], 16
    $region13: #{tpu_custom_call.1} parent=1 // pred_fallthru
      _
    // Predicated region
    $region14: #{tpu_custom_call.1} parent=1 // pred_check
      _
    $region15: #{tpu_custom_call.1} parent=1 // pred_check_branch
      %35 = sbr.rel (0) target = $region17
    $region16: #{tpu_custom_call.1} parent=1 // pred_region
      %36 = dma.done [#allocation3], 256
    $region17: #{tpu_custom_call.1} parent=1 // pred_fallthru
      _
    %37 = sfence
    %s38 = sld [smem:[#allocation2]]
    %s39 = sld [smem:[#allocation2 + $0x1]]
    %v40 = vld [vmem:[#allocation7] sm:$0xff]
    %v41 = vld [vmem:[#allocation7 + $0x8] sm:$0xff]
    %v42 = vlaneseq
    %v43 = vand.u32 %v42, 127
    %v44 = vadd.s32 %v43, 128
    %vm45 = vcmp.ge.s32.totalorder %v43, 32
    %vm46 = vcmp.ge.s32.totalorder %v44, 32
    %v47 = vsel %vm45, 1, 0
    %v48 = vsel %vm46, 1, 0
    %v49 = vcvt.s32.f32 %v47
    %v50 = vcvt.s32.f32 %v48
    %vm51 = vcmp.ge.s32.totalorder %v43, 64
    %vm52 = vcmp.ge.s32.totalorder %v44, 64
    %v53 = vsel %vm51, 1, 0
    %v54 = vsel %vm52, 1, 0
    %v55 = vcvt.s32.f32 %v53
    %v56 = vcvt.s32.f32 %v54
    %57 = vrot.lane.b32.xlu0 %v40, 32
    %v58 = vpop.permute.xlu0 %57
    %59 = vrot.lane.b32.xlu0 %v41, 32
    %v60 = vpop.permute.xlu0 %59
    %vm61 = vcmp.lt.s32.totalorder %v43, 32
    %v62 = vsel %vm61, %v58, %v60
    %v63 = vsel %vm61, %v60, %v58
    %v64 = vmul.f32 %v63, %v49
    %v65 = vmul.f32 %v62, %v50
    %66 = vrot.lane.b32.xlu0 %v40, 64
    %v67 = vpop.permute.xlu0 %66
    %68 = vrot.lane.b32.xlu0 %v41, 64
    %v69 = vpop.permute.xlu0 %68
    %vm70 = vcmp.lt.s32.totalorder %v43, 64
    %v71 = vsel %vm70, %v67, %v69
    %v72 = vsel %vm70, %v69, %v67
    %v73 = vmul.f32 %v72, %v55
    %v74 = vmul.f32 %v71, %v56
    %v75 = vstv %s38
    %v76 = vmul.f32 %v75, %v64
    %v77 = vmul.f32 %v75, %v65
    %v78 = vstv %s39
    %v79 = vmul.f32 %v78, %v73
    %v80 = vmul.f32 %v78, %v74
    %v81 = vadd.f32 %v76, %v79
    %v82 = vadd.f32 %v77, %v80
    %v83 = vsub.f32 0.0, %v81
    %v84 = vsub.f32 0.0, %v82
    %v85 = vadd.f32 %v40, %v83
    %v86 = vadd.f32 %v41, %v84
    %87 = vrot.lane.b32.xlu0 %v83, 32
    %v88 = vpop.permute.xlu0 %87
    %89 = vrot.lane.b32.xlu0 %v84, 32
    %v90 = vpop.permute.xlu0 %89
    %v91 = vsel %vm61, %v88, %v90
    %v92 = vsel %vm61, %v90, %v88
    %v93 = vmul.f32 %v92, %v49
    %v94 = vmul.f32 %v91, %v50
    %95 = vrot.lane.b32.xlu0 %v83, 64
    %v96 = vpop.permute.xlu0 %95
    %97 = vrot.lane.b32.xlu0 %v84, 64
    %v98 = vpop.permute.xlu0 %97
    %v99 = vsel %vm70, %v96, %v98
    %v100 = vsel %vm70, %v98, %v96
    %v101 = vmul.f32 %v100, %v55
    %v102 = vmul.f32 %v99, %v56
    %v103 = vmul.f32 %v75, %v93
    %v104 = vmul.f32 %v75, %v94
    %v105 = vmul.f32 %v78, %v101
    %v106 = vmul.f32 %v78, %v102
    %v107 = vadd.f32 %v103, %v105
    %v108 = vadd.f32 %v104, %v106
    %v109 = vsub.f32 0.0, %v107
    %v110 = vsub.f32 0.0, %v108
    %v111 = vadd.f32 %v85, %v109
    %v112 = vadd.f32 %v86, %v110
    %113 = vrot.lane.b32.xlu0 %v109, 32
    %v114 = vpop.permute.xlu0 %113
    %115 = vrot.lane.b32.xlu0 %v110, 32
    %v116 = vpop.permute.xlu0 %115
    %v117 = vsel %vm61, %v114, %v116
    %v118 = vsel %vm61, %v116, %v114
    %v119 = vmul.f32 %v118, %v49
    %v120 = vmul.f32 %v117, %v50
    %121 = vrot.lane.b32.xlu0 %v109, 64
    %v122 = vpop.permute.xlu0 %121
    %123 = vrot.lane.b32.xlu0 %v110, 64
    %v124 = vpop.permute.xlu0 %123
    %v125 = vsel %vm70, %v122, %v124
    %v126 = vsel %vm70, %v124, %v122
    %v127 = vmul.f32 %v126, %v55
    %v128 = vmul.f32 %v125, %v56
    %v129 = vmul.f32 %v75, %v119
    %v130 = vmul.f32 %v75, %v120
    %v131 = vmul.f32 %v78, %v127
    %v132 = vmul.f32 %v78, %v128
    %v133 = vadd.f32 %v129, %v131
    %v134 = vadd.f32 %v130, %v132
    %v135 = vsub.f32 0.0, %v133
    %v136 = vsub.f32 0.0, %v134
    %v137 = vadd.f32 %v111, %v135
    %v138 = vadd.f32 %v112, %v136
    %139 = vrot.lane.b32.xlu0 %v135, 32
    %v140 = vpop.permute.xlu0 %139
    %141 = vrot.lane.b32.xlu0 %v136, 32
    %v142 = vpop.permute.xlu0 %141
    %v143 = vsel %vm61, %v140, %v142
    %v144 = vsel %vm61, %v142, %v140
    %v145 = vmul.f32 %v144, %v49
    %v146 = vmul.f32 %v143, %v50
    %147 = vrot.lane.b32.xlu0 %v135, 64
    %v148 = vpop.permute.xlu0 %147
    %149 = vrot.lane.b32.xlu0 %v136, 64
    %v150 = vpop.permute.xlu0 %149
    %v151 = vsel %vm70, %v148, %v150
    %v152 = vsel %vm70, %v150, %v148
    %v153 = vmul.f32 %v152, %v55
    %v154 = vmul.f32 %v151, %v56
    %v155 = vmul.f32 %v75, %v145
    %v156 = vmul.f32 %v75, %v146
    %v157 = vmul.f32 %v78, %v153
    %v158 = vmul.f32 %v78, %v154
    %v159 = vadd.f32 %v155, %v157
    %v160 = vadd.f32 %v156, %v158
    %v161 = vsub.f32 0.0, %v159
    %v162 = vsub.f32 0.0, %v160
    %v163 = vadd.f32 %v137, %v161
    %v164 = vadd.f32 %v138, %v162
    %165 = vrot.lane.b32.xlu0 %v161, 32
    %v166 = vpop.permute.xlu0 %165
    %167 = vrot.lane.b32.xlu0 %v162, 32
    %v168 = vpop.permute.xlu0 %167
    %v169 = vsel %vm61, %v166, %v168
    %v170 = vsel %vm61, %v168, %v166
    %v171 = vmul.f32 %v170, %v49
    %v172 = vmul.f32 %v169, %v50
    %173 = vrot.lane.b32.xlu0 %v161, 64
    %v174 = vpop.permute.xlu0 %173
    %175 = vrot.lane.b32.xlu0 %v162, 64
    %v176 = vpop.permute.xlu0 %175
    %v177 = vsel %vm70, %v174, %v176
    %v178 = vsel %vm70, %v176, %v174
    %v179 = vmul.f32 %v178, %v55
    %v180 = vmul.f32 %v177, %v56
    %v181 = vmul.f32 %v75, %v171
    %v182 = vmul.f32 %v75, %v172
    %v183 = vmul.f32 %v78, %v179
    %v184 = vmul.f32 %v78, %v180
    %v185 = vadd.f32 %v181, %v183
    %v186 = vadd.f32 %v182, %v184
    %v187 = vsub.f32 0.0, %v185
    %v188 = vsub.f32 0.0, %v186
    %v189 = vadd.f32 %v163, %v187
    %v190 = vadd.f32 %v164, %v188
    %191 = vrot.lane.b32.xlu0 %v187, 32
    %v192 = vpop.permute.xlu0 %191
    %193 = vrot.lane.b32.xlu0 %v188, 32
    %v194 = vpop.permute.xlu0 %193
    %v195 = vsel %vm61, %v192, %v194
    %v196 = vsel %vm61, %v194, %v192
    %v197 = vmul.f32 %v196, %v49
    %v198 = vmul.f32 %v195, %v50
    %199 = vrot.lane.b32.xlu0 %v187, 64
    %v200 = vpop.permute.xlu0 %199
    %201 = vrot.lane.b32.xlu0 %v188, 64
    %v202 = vpop.permute.xlu0 %201
    %v203 = vsel %vm70, %v200, %v202
    %v204 = vsel %vm70, %v202, %v200
    %v205 = vmul.f32 %v204, %v55
    %v206 = vmul.f32 %v203, %v56
    %v207 = vmul.f32 %v75, %v197
    %v208 = vmul.f32 %v75, %v198
    %v209 = vmul.f32 %v78, %v205
    %v210 = vmul.f32 %v78, %v206
    %v211 = vadd.f32 %v207, %v209
    %v212 = vadd.f32 %v208, %v210
    %v213 = vsub.f32 0.0, %v211
    %v214 = vsub.f32 0.0, %v212
    %v215 = vadd.f32 %v189, %v213
    %v216 = vadd.f32 %v190, %v214
    %217 = vrot.lane.b32.xlu0 %v213, 32
    %v218 = vpop.permute.xlu0 %217
    %219 = vrot.lane.b32.xlu0 %v214, 32
    %v220 = vpop.permute.xlu0 %219
    %v221 = vsel %vm61, %v218, %v220
    %v222 = vsel %vm61, %v220, %v218
    %v223 = vmul.f32 %v222, %v49
    %v224 = vmul.f32 %v221, %v50
    %225 = vrot.lane.b32.xlu0 %v213, 64
    %v226 = vpop.permute.xlu0 %225
    %227 = vrot.lane.b32.xlu0 %v214, 64
    %v228 = vpop.permute.xlu0 %227
    %v229 = vsel %vm70, %v226, %v228
    %v230 = vsel %vm70, %v228, %v226
    %v231 = vmul.f32 %v230, %v55
    %v232 = vmul.f32 %v229, %v56
    %v233 = vmul.f32 %v75, %v223
    %v234 = vmul.f32 %v75, %v224
    %v235 = vmul.f32 %v78, %v231
    %v236 = vmul.f32 %v78, %v232
    %v237 = vadd.f32 %v233, %v235
    %v238 = vadd.f32 %v234, %v236
    %v239 = vsub.f32 0.0, %v237
    %v240 = vsub.f32 0.0, %v238
    %v241 = vadd.f32 %v215, %v239
    %v242 = vadd.f32 %v216, %v240
    %243 = vst [vmem:[#allocation8] sm:$0xff] %v241
    %244 = vst [vmem:[#allocation8 + $0x8] sm:$0xff] %v242
    %vm245 = vcmp.ge.s32.totalorder %v43, 192
    %vm246 = vcmp.ge.s32.totalorder %v44, 192
    %v247 = vsel %vm245, %v241, 0.0
    %v248 = vsel %vm246, %v242, 0.0
    %v249 = vmul.f32 %v247, %v247
    %v250 = vmul.f32 %v248, %v248
    %vm251 = vcmask 1040384
    %v252 = vsel %vm251, %v249, 0.0
    %v253 = vsel %vm251, %v250, 0.0
    %v254 = vadd.f32 %v252, %v253
    %255 = vadd.xlane.f32.xlu0 %v254
    %v256 = vpop.xlane.xlu0 %255
    %v257 = vrot.slane %v256, 4
    %v258 = vadd.f32 %v256, %v257
    %v259 = vrot.slane %v258, 2
    %v260 = vadd.f32 %v258, %v259
    %v261 = vrot.slane %v260, 1
    %v262 = vadd.f32 %v260, %v261
    %s263 = vtos %v262
    %s264 = scalar_lea.smem [#allocation9], 0
    %265 = sst [smem:[%s264]] %s263
    // Predicated region
    $region18: #{tpu_custom_call.1} parent=1 // pred_check
      _
    $region19: #{tpu_custom_call.1} parent=1 // pred_check_branch
      %267 = sbr.rel (0) target = $region21
    $region20: #{tpu_custom_call.1} parent=1 // pred_region
      %s269 = ssub.s32 256, 256
      %270 = vsyncadd [#allocation4], %s269
      %s272 = sshll.u32 [#allocation8], 4
      %s273 = int_to_ptr.vmem [resolvable:$true] %s272
      %275 = dma.vmem_to_hbm [thread:$0]  %s273, 256, %s2, [#allocation4]
    $region21: #{tpu_custom_call.1} parent=1 // pred_fallthru
      _
    // Predicated region
    $region22: #{tpu_custom_call.1} parent=1 // pred_check
      _
    $region23: #{tpu_custom_call.1} parent=1 // pred_check_branch
      %277 = sbr.rel (0) target = $region25
    $region24: #{tpu_custom_call.1} parent=1 // pred_region
      %s279 = ssub.s32 16, 16
      %280 = vsyncadd [#allocation6], %s279
      %283 = dma.smem_to_hbm [#allocation9], 16, %s3, [#allocation6]
    $region25: #{tpu_custom_call.1} parent=1 // pred_fallthru
      _
    // Predicated region
    $region26: #{tpu_custom_call.1} parent=1 // pred_check
      _
    $region27: #{tpu_custom_call.1} parent=1 // pred_check_branch
      %285 = sbr.rel (0) target = $region29
    $region28: #{tpu_custom_call.1} parent=1 // pred_region
      %286 = dma.done [#allocation4], 256
    $region29: #{tpu_custom_call.1} parent=1 // pred_fallthru
      _
    // Predicated region
    $region30: #{tpu_custom_call.1} parent=1 // pred_check
      _
    $region31: #{tpu_custom_call.1} parent=1 // pred_check_branch
      %288 = sbr.rel (0) target = $region33
    $region32: #{tpu_custom_call.1} parent=1 // pred_region
      %289 = dma.done [#allocation6], 16
    $region33: #{tpu_custom_call.1} parent=1 // pred_fallthru
      _
    %290 = sfence
    %291 = vsyncpa [#allocation3], 1
    %292 = vsyncpa [#allocation4], 1
    %293 = vsyncpa [#allocation5], 1
    %294 = vsyncpa [#allocation6], 1

</llo_original>
